<compile_context>
chip_gen: v5e
topology: v5e:2x2
jax: 0.10.0
libtpu: 0.0.40
codegen_flags: <defaults>
</compile_context>

<pallas_src>
import functools

import jax
import jax.numpy as jnp
from jax import lax
from jax.experimental import pallas as pl
from jax.experimental.pallas import tpu as pltpu

LANE = 128
MAX_TILE_ROWS = 1024      # (1024, 128) f32 block = 512 KiB per input
NUM_PARTIALS = 2          # leading parallel axis for the reduction (v7x megacore)


def _round_up(v, m):
    return ((v + m - 1) // m) * m


def _weighted_bce(x, t, alpha, gamma):
    """Elementwise varifocal loss, sharing a single exp(-|x|) across terms."""
    e = jnp.exp(-jnp.abs(x))                  # reused by sigmoid and log1p
    inv = 1.0 / (1.0 + e)
    p = jnp.where(x >= 0, inv, e * inv)       # numerically stable sigmoid(x)
    if gamma == 2.0:
        p_pow = p * p
    elif float(gamma).is_integer():
        p_pow = lax.integer_pow(p, int(gamma))
    else:
        p_pow = p ** gamma
    w = jnp.where(t > 0, t, alpha * p_pow)
    # binary_cross_entropy_with_logits (reduction='none'):
    #   max(x, 0) - x*t + log(1 + exp(-|x|))
    bce = jnp.maximum(x, 0.0) - x * t + jnp.log1p(e)
    return bce * w


def _vfl_reduce_kernel(x_ref, t_ref, out_ref, acc_ref, *, alpha, gamma,
                       total, needs_mask):
    c = pl.program_id(0)          # partial-sum index ("parallel")
    i = pl.program_id(1)          # reduction step    ("arbitrary")
    steps = pl.num_programs(1)

    @pl.when(i == 0)
    def _():
        acc_ref[...] = jnp.zeros_like(acc_ref)

    x = x_ref[...].astype(jnp.float32)
    t = t_ref[...].astype(jnp.float32)
    loss = _weighted_bce(x, t, alpha, gamma)

    if needs_mask:
        # Zero the padded tail exactly (pure VPU work; emitted only if pad > 0).
        tile_rows = x.shape[0]
        blk = c * steps + i
        row = lax.broadcasted_iota(jnp.int32, x.shape, 0)
        col = lax.broadcasted_iota(jnp.int32, x.shape, 1)
        idx = (blk * tile_rows + row) * LANE + col
        loss = jnp.where(idx < total, loss, 0.0)

    acc_ref[...] += loss          # elementwise VMEM accumulate, no per-step reduce

    @pl.when(i == steps - 1)
    def _():
        acc = acc_ref[...]
        # Fold (tile_rows, 128) -> (8, 128) once; final scalar sum done in wrapper.
        out_ref[...] = acc.reshape(acc.shape[0] // 8, 8, LANE).sum(axis=0)


def _vfl_elementwise_kernel(x_ref, t_ref, o_ref, *, alpha, gamma):
    x = x_ref[...].astype(jnp.float32)
    t = t_ref[...].astype(jnp.float32)
    o_ref[...] = _weighted_bce(x, t, alpha, gamma)


def varifocal_loss(logits, targets_q, alpha=0.75, gamma=2.0, reduction="mean"):
    orig_shape = logits.shape
    total = logits.size
    x = logits.reshape(-1)
    t = targets_q.reshape(-1)
    rows = pl.cdiv(total, LANE)

    if reduction in ("mean", "sum"):
        # Split rows into NUM_PARTIALS contiguous chunks of `steps` tiles each.
        steps = pl.cdiv(pl.cdiv(rows, NUM_PARTIALS), MAX_TILE_ROWS)
        tile_rows = _round_up(pl.cdiv(rows, NUM_PARTIALS * steps), 8)
        padded_rows = NUM_PARTIALS * steps * tile_rows
        pad = padded_rows * LANE - total
        if pad:
            x = jnp.pad(x, (0, pad))
            t = jnp.pad(t, (0, pad))
        x2 = x.reshape(padded_rows, LANE)
        t2 = t.reshape(padded_rows, LANE)

        in_map = lambda c, i: (c * steps + i, 0)
        out = pl.pallas_call(
            functools.partial(_vfl_reduce_kernel, alpha=alpha, gamma=gamma,
                              total=total, needs_mask=pad > 0),
            out_shape=jax.ShapeDtypeStruct((NUM_PARTIALS * 8, LANE), jnp.float32),
            grid_spec=pltpu.PrefetchScalarGridSpec(
                num_scalar_prefetch=0,
                grid=(NUM_PARTIALS, steps),
                in_specs=[
                    pl.BlockSpec((tile_rows, LANE), in_map),
                    pl.BlockSpec((tile_rows, LANE), in_map),
                ],
                out_specs=pl.BlockSpec((8, LANE), lambda c, i: (c, 0)),
                scratch_shapes=[pltpu.VMEM((tile_rows, LANE), jnp.float32)],
            ),
            compiler_params=pltpu.CompilerParams(
                dimension_semantics=("parallel", "arbitrary"),
            ),
        )(x2, t2)

        total_sum = jnp.sum(out)
        if reduction == "mean":
            return total_sum / total
        return total_sum

    # reduction not in ('mean', 'sum') -> elementwise loss (PyTorch fallthrough)
    n_tiles = pl.cdiv(rows, MAX_TILE_ROWS)
    tile_rows = _round_up(pl.cdiv(rows, n_tiles), 8)
    padded_rows = n_tiles * tile_rows
    pad = padded_rows * LANE - total
    if pad:
        x = jnp.pad(x, (0, pad))
        t = jnp.pad(t, (0, pad))
    x2 = x.reshape(padded_rows, LANE)
    t2 = t.reshape(padded_rows, LANE)

    out = pl.pallas_call(
        functools.partial(_vfl_elementwise_kernel, alpha=alpha, gamma=gamma),
        out_shape=jax.ShapeDtypeStruct((padded_rows, LANE), jnp.float32),
        grid_spec=pltpu.PrefetchScalarGridSpec(
            num_scalar_prefetch=0,
            grid=(n_tiles,),
            in_specs=[
                pl.BlockSpec((tile_rows, LANE), lambda i: (i, 0)),
                pl.BlockSpec((tile_rows, LANE), lambda i: (i, 0)),
            ],
            out_specs=pl.BlockSpec((tile_rows, LANE), lambda i: (i, 0)),
        ),
        compiler_params=pltpu.CompilerParams(
            dimension_semantics=("parallel",),
        ),
    )(x2, t2)
    return out.reshape(-1)[:total].reshape(orig_shape)


def _reference(logits, targets_q, alpha=0.75, gamma=2.0, reduction="mean"):
    p = jax.nn.sigmoid(logits)
    w = jnp.where(targets_q > 0, targets_q, alpha * p ** gamma)
    bce = (jnp.maximum(logits, 0.0) - logits * targets_q
           + jnp.log1p(jnp.exp(-jnp.abs(logits))))
    loss = bce * w
    if reduction == "sum":
        return loss.sum()
    if reduction == "mean":
        return loss.mean()
    return loss


if __name__ == "__main__":
    key = jax.random.PRNGKey(0)
    k1, k2, k3 = jax.random.split(key, 3)

    # Detection-head-style logits / quality targets (NCHW for the PyTorch module;
    # the loss is elementwise + reduce, so the kernel just flattens them).
    shape = (2, 4, 16, 16)
    logits = jax.random.normal(k1, shape, dtype=jnp.float32) * 2.0
    quality = jax.random.uniform(k2, shape, dtype=jnp.float32)
    pos = jax.random.uniform(k3, shape, dtype=jnp.float32) > 0.8
    targets_q = jnp.where(pos, quality, 0.0)

    out_mean = jax.block_until_ready(
        varifocal_loss(logits, targets_q, alpha=0.75, gamma=2.0, reduction="mean"))
    ref_mean = _reference(logits, targets_q, reduction="mean")
    assert jnp.allclose(out_mean, ref_mean, rtol=1e-5, atol=1e-6), (out_mean, ref_mean)

    out_sum = jax.block_until_ready(
        varifocal_loss(logits, targets_q, reduction="sum"))
    ref_sum = _reference(logits, targets_q, reduction="sum")
    assert jnp.allclose(out_sum, ref_sum, rtol=1e-5, atol=1e-4), (out_sum, ref_sum)

    out_none = jax.block_until_ready(
        varifocal_loss(logits, targets_q, reduction="none"))
    ref_none = _reference(logits, targets_q, reduction="none")
    assert jnp.allclose(out_none, ref_none, rtol=1e-5, atol=1e-6)

    # Ragged total (not a multiple of 128) exercises the in-kernel tail mask.
    shape2 = (2, 3, 7, 5)
    l2 = jax.random.normal(k1, shape2, dtype=jnp.float32) * 2.0
    t2 = jnp.where(jax.random.uniform(k2, shape2) > 0.7,
                   jax.random.uniform(k3, shape2), 0.0)
    out2 = jax.block_until_ready(varifocal_loss(l2, t2, reduction="mean"))
    ref2 = _reference(l2, t2, reduction="mean")
    assert jnp.allclose(out2, ref2, rtol=1e-5, atol=1e-6), (out2, ref2)

    print("KERNEL_OK")
</pallas_src>

<mosaic_0001>
module attributes {stable_mosaic.version = 11 : i64} {
  func.func @_vfl_reduce_kernel(%arg0: i32, %arg1: i32, %arg2: memref<8x128xf32, #tpu.memory_space<vmem>>, %arg3: memref<8x128xf32, #tpu.memory_space<vmem>>, %arg4: memref<8x128xf32, #tpu.memory_space<vmem>>, %arg5: memref<8x128xf32, #tpu.memory_space<vmem>>) attributes {dimension_semantics = [#tpu.dimension_semantics<parallel>, #tpu.dimension_semantics<arbitrary>], iteration_bounds = array<i64: 2, 1>, scalar_prefetch = 0 : i64, scratch_operands = 1 : i64, tpu.core_type = #tpu.core_type<tc>, window_params = [{transform_indices = @transform_0, window_bounds = array<i64: 8, 128>}, {transform_indices = @transform_1, window_bounds = array<i64: 8, 128>}, {transform_indices = @transform_2, window_bounds = array<i64: 8, 128>}]} {
    %c0_i32 = arith.constant 0 : i32
    %0 = arith.cmpi eq, %arg1, %c0_i32 : i32
    %1 = arith.extui %0 : i1 to i32
    %c0_i32_0 = arith.constant 0 : i32
    %2 = arith.cmpi ne, %1, %c0_i32_0 : i32
    scf.if %2 {
      %cst_16 = arith.constant 0.000000e+00 : f32
      %36 = vector.broadcast %cst_16 : f32 to vector<8x128xf32>
      %c0_17 = arith.constant 0 : index
      %c0_18 = arith.constant 0 : index
      %37 = vector.load %arg5[%c0_17, %c0_18] : memref<8x128xf32, #tpu.memory_space<vmem>>, vector<8x128xf32>
      tpu.vector_store %arg5[%c0_17, %c0_18], %36 {strides = array<i32>} : memref<8x128xf32, #tpu.memory_space<vmem>>, vector<8x128xf32>,
    } else {
    }
    %c0 = arith.constant 0 : index
    %c0_1 = arith.constant 0 : index
    %3 = vector.load %arg2[%c0, %c0_1] : memref<8x128xf32, #tpu.memory_space<vmem>>, vector<8x128xf32>
    %c0_2 = arith.constant 0 : index
    %c0_3 = arith.constant 0 : index
    %4 = vector.load %arg3[%c0_2, %c0_3] : memref<8x128xf32, #tpu.memory_space<vmem>>, vector<8x128xf32>
    %5 = math.absf %3 : vector<8x128xf32>
    %cst = arith.constant 0.000000e+00 : f32
    %6 = vector.broadcast %cst : f32 to vector<8x128xf32>
    %7 = arith.subf %6, %5 : vector<8x128xf32>
    %8 = math.exp %7 : vector<8x128xf32>
    %cst_4 = arith.constant 1.000000e+00 : f32
    %9 = vector.broadcast %cst_4 : f32 to vector<8x128xf32>
    %10 = arith.addf %9, %8 : vector<8x128xf32>
    %cst_5 = arith.constant 1.000000e+00 : f32
    %11 = vector.broadcast %cst_5 : f32 to vector<8x128xf32>
    %12 = arith.divf %11, %10 : vector<8x128xf32>
    %cst_6 = arith.constant 0.000000e+00 : f32
    %13 = vector.broadcast %cst_6 : f32 to vector<8x128xf32>
    %14 = arith.cmpf oge, %3, %13 : vector<8x128xf32>
    %15 = arith.mulf %8, %12 : vector<8x128xf32>
    %16 = arith.select %14, %12, %15 : vector<8x128xi1>, vector<8x128xf32>
    %17 = arith.mulf %16, %16 : vector<8x128xf32>
    %cst_7 = arith.constant 0.000000e+00 : f32
    %18 = vector.broadcast %cst_7 : f32 to vector<8x128xf32>
    %19 = arith.cmpf ogt, %4, %18 : vector<8x128xf32>
    %cst_8 = arith.constant 7.500000e-01 : f32
    %20 = vector.broadcast %cst_8 : f32 to vector<8x128xf32>
    %21 = arith.mulf %20, %17 : vector<8x128xf32>
    %22 = arith.select %19, %4, %21 : vector<8x128xi1>, vector<8x128xf32>
    %cst_9 = arith.constant 0.000000e+00 : f32
    %23 = vector.broadcast %cst_9 : f32 to vector<8x128xf32>
    %24 = arith.maximumf %3, %23 : vector<8x128xf32>
    %25 = arith.mulf %3, %4 : vector<8x128xf32>
    %26 = arith.subf %24, %25 : vector<8x128xf32>
    %27 = math.log1p %8 : vector<8x128xf32>
    %28 = arith.addf %26, %27 : vector<8x128xf32>
    %29 = arith.mulf %28, %22 : vector<8x128xf32>
    %c0_10 = arith.constant 0 : index
    %c0_11 = arith.constant 0 : index
    %30 = vector.load %arg5[%c0_10, %c0_11] : memref<8x128xf32, #tpu.memory_space<vmem>>, vector<8x128xf32>
    %31 = arith.addf %30, %29 : vector<8x128xf32>
    %c0_12 = arith.constant 0 : index
    %c0_13 = arith.constant 0 : index
    %32 = vector.load %arg5[%c0_12, %c0_13] : memref<8x128xf32, #tpu.memory_space<vmem>>, vector<8x128xf32>
    tpu.vector_store %arg5[%c0_12, %c0_13], %31 {strides = array<i32>} : memref<8x128xf32, #tpu.memory_space<vmem>>, vector<8x128xf32>,
    %c0_i32_14 = arith.constant 0 : i32
    %33 = arith.cmpi eq, %arg1, %c0_i32_14 : i32
    %34 = arith.extui %33 : i1 to i32
    %c0_i32_15 = arith.constant 0 : i32
    %35 = arith.cmpi ne, %34, %c0_i32_15 : i32
    scf.if %35 {
      %c0_16 = arith.constant 0 : index
      %c0_17 = arith.constant 0 : index
      %36 = vector.load %arg5[%c0_16, %c0_17] : memref<8x128xf32, #tpu.memory_space<vmem>>, vector<8x128xf32>
      %37 = vector.shape_cast %36 : vector<8x128xf32> to vector<1x8x128xf32>
      %cst_18 = arith.constant dense<0.000000e+00> : vector<8x128xf32>
      %38 = vector.multi_reduction <add>, %37, %cst_18 [0] : vector<1x8x128xf32> to vector<8x128xf32>
      %c0_19 = arith.constant 0 : index
      %c0_20 = arith.constant 0 : index
      %39 = vector.load %arg4[%c0_19, %c0_20] : memref<8x128xf32, #tpu.memory_space<vmem>>, vector<8x128xf32>
      tpu.vector_store %arg4[%c0_19, %c0_20], %38 {strides = array<i32>} : memref<8x128xf32, #tpu.memory_space<vmem>>, vector<8x128xf32>,
    } else {
    }
    return
  }
  func.func @transform_0(%arg0: i32, %arg1: i32) -> (i32, i32) {
    %c1_i32 = arith.constant 1 : i32
    %0 = arith.muli %arg0, %c1_i32 : i32
    %1 = arith.addi %0, %arg1 : i32
    %c0_i32 = arith.constant 0 : i32
    %c0_i32_0 = arith.constant 0 : i32
    return %1, %c0_i32 : i32, i32
  }
  func.func @transform_1(%arg0: i32, %arg1: i32) -> (i32, i32) {
    %c1_i32 = arith.constant 1 : i32
    %0 = arith.muli %arg0, %c1_i32 : i32
    %1 = arith.addi %0, %arg1 : i32
    %c0_i32 = arith.constant 0 : i32
    %c0_i32_0 = arith.constant 0 : i32
    return %1, %c0_i32 : i32, i32
  }
  func.func @transform_2(%arg0: i32, %arg1: i32) -> (i32, i32) {
    %c0_i32 = arith.constant 0 : i32
    %c0_i32_0 = arith.constant 0 : i32
    return %arg0, %c0_i32 : i32, i32
  }
}

</mosaic_0001>

<llo_original>
// kernel: tpu_custom_call.1
$region0: #{tpu_custom_call.1}
  #allocation0 [shape = 'u32[]', space=smem, size = 0x4, offset = 0x4, fixed_abs, tag = 'smem constant byte address 0x4 - core index']
  #allocation1 [shape = 'u32[72,128]{1,0:T(1,128)}', space=vmem, size = 0x9000, scoped, tag = 'internal scratch']
  #allocation2 [shape = 'f32[8,128]{1,0:T(8,128)}', space=vmem, size = 0x1000, scoped, tag = 'scratch operand']
  %s0 = inlined_call_operand.hbm [shape: f32[16,128], index: 0, kind: input, shape index: {}]
  %s1 = inlined_call_operand.hbm [shape: f32[16,128], index: 1, kind: input, shape index: {}]
  %s2 = inlined_call_operand.hbm [shape: f32[16,128], index: 2, kind: output, shape index: {}]
  %s3 = sld [smem:[#allocation0]]
  $region57: #{tpu_custom_call.1} parent=0
    _
  %s5 = ssub.s32 1, %s3
  %s6 = scalar_select 0, %s5, %s3
  $region1: #{tpu_custom_call.1} parent=0
    #allocation3 [shape = 'u8[8192]{0}', space=vmem, size = 0x2000, scoped, tag = 'input window, operand 0']
    #allocation4 [shape = 's32[2]{0}', space=sflag, size = 0x8, scoped, tag = 'scoped memory for tpu_custom_call.1']
    #allocation5 [shape = 's32[2]{0}', space=sflag, size = 0x8, scoped, tag = 'scoped memory for tpu_custom_call.1']
    #allocation6 [shape = 'u8[8192]{0}', space=vmem, size = 0x2000, scoped, tag = 'input window, operand 1']
    #allocation7 [shape = 's32[2]{0}', space=sflag, size = 0x8, scoped, tag = 'scoped memory for tpu_custom_call.1']
    #allocation8 [shape = 'u8[8192]{0}', space=vmem, size = 0x2000, scoped, tag = 'output window, operand 0']
    %7 = vsyncpa [#allocation4], 0
    %s8 = scalar_lea.sflag [#allocation4], 1
    %9 = vsyncpa %s8, 0
    %10 = vsyncpa [#allocation7], 0
    %s11 = scalar_lea.sflag [#allocation7], 1
    %12 = vsyncpa %s11, 0
    %13 = vsyncpa [#allocation5], 0
    %s14 = scalar_lea.sflag [#allocation5], 1
    %15 = vsyncpa %s14, 0
    loop: start=0, step=1, limit=4
    $region2: #{tpu_custom_call.1} parent=1 // loop_pre_header
      _
    $region3: #{tpu_custom_call.1} parent=1 // loop_header
      %s17 = sphi 0, %s21
      %p18 = scmp.ge.s32.totalorder %s17, 4
      %s24 = sphi 0, %s36
      %s25 = sphi 0, %s32
      %s26 = sphi 0, %s24
      %s27 = sphi 0, %s25
      %s28 = sphi 0, %s26
      %s29 = sphi 0, %s27
      %s41 = sphi 0, %s43
      %s44 = sphi 0, %s41
      %s45 = sphi 0, %s44
      %s61 = sphi 0, %s45
      %s69 = sphi 0, %s71
      %s72 = sphi 0, %s69
      %s73 = sphi 0, %s72
      %s89 = sphi 0, %s73
      %s95 = sphi 0, %s97
      %s98 = sphi 0, %s95
      %s99 = sphi 0, %s98
      %s115 = sphi 0, %s99
    $region4: #{tpu_custom_call.1} parent=1 // loop_header_branch
      %20 = sbr.rel (%p18) target = $region8
    $region5: #{tpu_custom_call.1} parent=1 // loop_body
      %s22 = ssub.s32 %s17, 1
      %s23 = ssub.s32 %s17, 2
      %s30 = sadd.s32 1, %s25
      %p31 = scmp.ge.s32.totalorder %s30, 1
      %s32 = scalar_select %p31, 0, %s30
      %s33 = sadd.s32 1, %s24
      %s34 = scalar_select %p31, %s33, %s24
      %p35 = scmp.ge.s32.totalorder %s34, 2
      %s36 = scalar_select %p35, 0, %s34
      %s37 = sadd.s32 %s24, %s25
      %s38 = sadd.s32 %s36, %s32
      %s39 = ssub.s32 %s37, %s38
      %p40 = scmp.eq.s32.totalorder %s39, 0
      %s42 = sadd.s32 %s41, 1
      %s43 = scalar_select %p40, %s41, %s42
      %p46 = pneg %p40
      %p47 = scmp.eq.s32.totalorder %s17, 1
      %p48 = por %p46, %p47
      %p49 = scmp.ne.s32.totalorder %s41, %s44
      %p50 = scmp.eq.s32.totalorder %s17, 0
      %p51 = por %p49, %p50
      %p52 = scmp.ne.s32.totalorder %s41, %s44
      %p53 = scmp.eq.s32.totalorder %s22, 1
      %p54 = por %p52, %p53
      %p55 = scmp.ne.s32.totalorder %s44, %s45
      %p56 = scmp.eq.s32.totalorder %s22, 0
      %p57 = por %p55, %p56
      %p58 = scmp.ne.s32.totalorder %s44, %s45
      %p59 = scmp.eq.s32.totalorder %s23, 1
      %p60 = por %p58, %p59
      %p62 = scmp.ne.s32.totalorder %s45, %s61
      %p63 = scmp.eq.s32.totalorder %s23, 0
      %p64 = por %p62, %p63
      %s65 = sadd.s32 %s24, %s25
      %s66 = sadd.s32 %s36, %s32
      %s67 = ssub.s32 %s65, %s66
      %p68 = scmp.eq.s32.totalorder %s67, 0
      %s70 = sadd.s32 %s69, 1
      %s71 = scalar_select %p68, %s69, %s70
      %p74 = pneg %p68
      %p75 = scmp.eq.s32.totalorder %s17, 1
      %p76 = por %p74, %p75
      %p77 = scmp.ne.s32.totalorder %s69, %s72
      %p78 = scmp.eq.s32.totalorder %s17, 0
      %p79 = por %p77, %p78
      %p80 = scmp.ne.s32.totalorder %s69, %s72
      %p81 = scmp.eq.s32.totalorder %s22, 1
      %p82 = por %p80, %p81
      %p83 = scmp.ne.s32.totalorder %s72, %s73
      %p84 = scmp.eq.s32.totalorder %s22, 0
      %p85 = por %p83, %p84
      %p86 = scmp.ne.s32.totalorder %s72, %s73
      %p87 = scmp.eq.s32.totalorder %s23, 1
      %p88 = por %p86, %p87
      %p90 = scmp.ne.s32.totalorder %s73, %s89
      %p91 = scmp.eq.s32.totalorder %s23, 0
      %p92 = por %p90, %p91
      %s93 = ssub.s32 %s24, %s36
      %p94 = scmp.eq.s32.totalorder %s93, 0
      %s96 = sadd.s32 %s95, 1
      %s97 = scalar_select %p94, %s95, %s96
      %p100 = pneg %p94
      %p101 = scmp.eq.s32.totalorder %s17, 1
      %p102 = por %p100, %p101
      %p103 = scmp.ne.s32.totalorder %s95, %s98
      %p104 = scmp.eq.s32.totalorder %s17, 0
      %p105 = por %p103, %p104
      %p106 = scmp.ne.s32.totalorder %s95, %s98
      %p107 = scmp.eq.s32.totalorder %s22, 1
      %p108 = por %p106, %p107
      %p109 = scmp.ne.s32.totalorder %s98, %s99
      %p110 = scmp.eq.s32.totalorder %s22, 0
      %p111 = por %p109, %p110
      %p112 = scmp.ne.s32.totalorder %s98, %s99
      %p113 = scmp.eq.s32.totalorder %s23, 1
      %p114 = por %p112, %p113
      %p116 = scmp.ne.s32.totalorder %s99, %s115
      %p117 = scmp.eq.s32.totalorder %s23, 0
      %p118 = por %p116, %p117
      %p119 = scmp.le.s32.totalorder 1, %s17
      %p120 = scmp.lt.s32.totalorder %s17, 3
      %p121 = pnand %p119, %p120
      %p122 = pneg %p121
      // Predicated region
      $region9: #{tpu_custom_call.1} parent=5 // pred_check
        _
      $region10: #{tpu_custom_call.1} parent=5 // pred_check_branch
        %124 = sbr.rel (%p121) target = $region12
      $region11: #{tpu_custom_call.1} parent=5 // pred_region
        %s125 = ssub.s32 %s17, 1
      $region12: #{tpu_custom_call.1} parent=5 // pred_fallthru
        _
      %p126 = scmp.lt.s32.totalorder %s17, 2
      // Predicated region
      $region13: #{tpu_custom_call.1} parent=5 // pred_check
        %p127 = pneg %p126
      $region14: #{tpu_custom_call.1} parent=5 // pred_check_branch
        %129 = sbr.rel (%p127) target = $region16
      $region15: #{tpu_custom_call.1} parent=5 // pred_region
        // Predicated region
        $region17: #{tpu_custom_call.1} parent=15 // pred_check
          %p130 = pneg %p51
        $region18: #{tpu_custom_call.1} parent=15 // pred_check_branch
          %132 = sbr.rel (%p130) target = $region20
        $region19: #{tpu_custom_call.1} parent=15 // pred_region
          %s133 = sand.u32 %s41, 1
          %s134 = scalar_lea.sflag [#allocation4], %s133
          %s135 = sand.u32 %s41, 1
          %s136 = smul.addr %s135, 8
          %s137 = scalar_lea.vmem [#allocation3], %s136
          %s138 = sadd.s32 %s24, %s25
          %140 = vsyncadd %s134, 0
          %s141 = smul.addr %s138, 8
          %s142 = scalar_lea.hbm %s0, %s141
          %s144 = sshll.u32 %s142, 4
          %s145 = int_to_ptr.hbm [resolvable:$true] %s144
          %s146 = sshll.u32 %s137, 4
          %s147 = int_to_ptr.vmem [resolvable:$true] %s146
          %149 = dma.hbm_to_vmem [thread:$0]  %s145, 128, %s147, %s134
        $region20: #{tpu_custom_call.1} parent=15 // pred_fallthru
          _
        // Predicated region
        $region21: #{tpu_custom_call.1} parent=15 // pred_check
          %p150 = pneg %p79
        $region22: #{tpu_custom_call.1} parent=15 // pred_check_branch
          %152 = sbr.rel (%p150) target = $region24
        $region23: #{tpu_custom_call.1} parent=15 // pred_region
          %s153 = sand.u32 %s69, 1
          %s154 = scalar_lea.sflag [#allocation7], %s153
          %s155 = sand.u32 %s69, 1
          %s156 = smul.addr %s155, 8
          %s157 = scalar_lea.vmem [#allocation6], %s156
          %s158 = sadd.s32 %s24, %s25
          %160 = vsyncadd %s154, 0
          %s161 = smul.addr %s158, 8
          %s162 = scalar_lea.hbm %s1, %s161
          %s164 = sshll.u32 %s162, 4
          %s165 = int_to_ptr.hbm [resolvable:$true] %s164
          %s166 = sshll.u32 %s157, 4
          %s167 = int_to_ptr.vmem [resolvable:$true] %s166
          %169 = dma.hbm_to_vmem [thread:$0]  %s165, 128, %s167, %s154
        $region24: #{tpu_custom_call.1} parent=15 // pred_fallthru
          _
      $region16: #{tpu_custom_call.1} parent=5 // pred_fallthru
        _
      %p170 = scmp.le.s32.totalorder 1, %s17
      %p171 = scmp.lt.s32.totalorder %s17, 3
      %p172 = pnand %p170, %p171
      %p173 = pneg %p172
      // Predicated region
      $region25: #{tpu_custom_call.1} parent=5 // pred_check
        _
      $region26: #{tpu_custom_call.1} parent=5 // pred_check_branch
        %175 = sbr.rel (%p172) target = $region28
      $region27: #{tpu_custom_call.1} parent=5 // pred_region
        %s176 = ssub.s32 %s17, 1
        %s177 = sand.u32 %s44, 1
        %s178 = scalar_lea.sflag [#allocation4], %s177
        %s179 = sand.u32 %s44, 1
        %s180 = smul.addr %s179, 8
        %s181 = scalar_lea.vmem [#allocation3], %s180
        // Predicated region
        $region29: #{tpu_custom_call.1} parent=27 // pred_check
          %p182 = pneg %p57
        $region30: #{tpu_custom_call.1} parent=27 // pred_check_branch
          %184 = sbr.rel (%p182) target = $region32
        $region31: #{tpu_custom_call.1} parent=27 // pred_region
          %186 = dma.done %s178, 128
        $region32: #{tpu_custom_call.1} parent=27 // pred_fallthru
          _
        %s187 = sand.u32 %s72, 1
        %s188 = scalar_lea.sflag [#allocation7], %s187
        %s189 = sand.u32 %s72, 1
        %s190 = smul.addr %s189, 8
        %s191 = scalar_lea.vmem [#allocation6], %s190
        // Predicated region
        $region33: #{tpu_custom_call.1} parent=27 // pred_check
          %p192 = pneg %p85
        $region34: #{tpu_custom_call.1} parent=27 // pred_check_branch
          %194 = sbr.rel (%p192) target = $region36
        $region35: #{tpu_custom_call.1} parent=27 // pred_region
          %196 = dma.done %s188, 128
        $region36: #{tpu_custom_call.1} parent=27 // pred_fallthru
          _
        %s197 = sand.u32 %s44, 1
        %s198 = scalar_lea.sflag [#allocation4], %s197
        %s199 = sand.u32 %s44, 1
        %s200 = smul.addr %s199, 8
        %s201 = scalar_lea.vmem [#allocation3], %s200
        %p202 = pneg %p57
        %p203 = pneg %p54
        %s204 = sand.u32 %s72, 1
        %s205 = scalar_lea.sflag [#allocation7], %s204
        %s206 = sand.u32 %s72, 1
        %s207 = smul.addr %s206, 8
        %s208 = scalar_lea.vmem [#allocation6], %s207
        %p209 = pneg %p85
        %p210 = pneg %p82
        %p211 = pneg %p111
        %p212 = pneg %p108
        %s213 = sand.u32 %s98, 1
        %s214 = scalar_lea.sflag [#allocation5], %s213
        %s215 = sand.u32 %s98, 1
        %s216 = smul.addr %s215, 8
        %s217 = scalar_lea.vmem [#allocation8], %s216
        %s218 = sadd.s32 %s26, %s27
        %s219 = sadd.s32 %s26, %s27
        %p220 = scmp.eq.s32.totalorder %s27, 0
        // Predicated region
        $region37: #{tpu_custom_call.1} parent=27 // pred_check
          %p221 = pneg %p220
        $region38: #{tpu_custom_call.1} parent=27 // pred_check_branch
          %223 = sbr.rel (%p221) target = $region40
        $region39: #{tpu_custom_call.1} parent=27 // pred_region
          %224 = vst [vmem:[#allocation2] sm:$0xff] 0.0
        $region40: #{tpu_custom_call.1} parent=27 // pred_fallthru
          _
        %v225 = vld [vmem:[%s181] sm:$0xff]
        %v226 = vld [vmem:[%s191] sm:$0xff]
        %v227 = vand.u32 2147483647, %v225
        %v228 = vsub.f32 0.0, %v227
        %v229 = vmul.f32 %v228, 1.442695
        %v230 = vpow.pop %v229
        %v231 = vadd.f32 %v230, 1.0
        %v232 = vrcp.pop %v231
        %v233 = vmul.f32 %v231, %v232
        %v234 = vsub.f32 1.0, %v233
        %v235 = vmul.f32 %v232, %v234
        %v236 = vadd.f32 %v232, %v235
        %vm237 = vweird.f32 %v231
        %vm238 = vweird.f32 %v232
        %vm239 = vmor %vm237, %vm238
        %v240 = vsel %vm239, %v232, %v236
        %v241 = vand.u32 2147483647, %v231
        %vm242 = vcmp.eq.f32.partialorder %v241, 8.507059e+37
        %v243 = vand.u32 %v231, 2147483648
        %v244 = vor.u32 1.1754944e-38, %v243
        %v245 = vsel %vm242, %v244, %v240
        %v246 = vmul.f32 1.0, %v245
        %vm247 = vcmp.ge.f32.partialorder %v225, 0.0
        %v248 = vmul.f32 %v230, %v246
        %v249 = vsel %vm247, %v246, %v248
        %v250 = vmul.f32 %v249, %v249
        %vm251 = vcmp.gt.f32.partialorder %v226, 0.0
        %v252 = vmul.f32 %v250, 0.75
        %v253 = vsel %vm251, %v226, %v252
        %v254 = vmax.f32 %v225, 0.0
        %v255 = vmul.f32 %v225, %v226
        %v256 = vsub.f32 %v254, %v255
        %v257 = vadd.f32 %v230, 1.0
        %v258 = vlog2.pop %v257
        %v259 = vmul.f32 %v258, 0.6931472
        %v260 = vmul.f32 -0.5, %v230
        %v261 = vadd.f32 %v260, 1.0
        %v262 = vmul.f32 %v261, %v230
        %v263 = vand.u32 2147483647, %v230
        %vm264 = vcmp.lt.f32.partialorder %v263, 0.0004427343
        %v265 = vsel %vm264, %v262, %v259
        %v266 = vadd.f32 %v256, %v265
        %v267 = vmul.f32 %v266, %v253
        %v268 = vld [vmem:[#allocation2] sm:$0xff]
        %v269 = vadd.f32 %v268, %v267
        %270 = vst [vmem:[#allocation2] sm:$0xff] %v269
        // Predicated region
        $region41: #{tpu_custom_call.1} parent=27 // pred_check
          %p271 = pneg %p220
        $region42: #{tpu_custom_call.1} parent=27 // pred_check_branch
          %273 = sbr.rel (%p271) target = $region44
        $region43: #{tpu_custom_call.1} parent=27 // pred_region
          %v274 = vld [vmem:[#allocation2] sm:$0xff]
          %v275 = vadd.f32 %v274, 0.0
          %276 = vst [vmem:[%s217] sm:$0xff] %v275
        $region44: #{tpu_custom_call.1} parent=27 // pred_fallthru
          _
        %s277 = sand.u32 %s98, 1
        %s278 = scalar_lea.sflag [#allocation5], %s277
        %s279 = sand.u32 %s98, 1
        %s280 = smul.addr %s279, 8
        %s281 = scalar_lea.vmem [#allocation8], %s280
        // Predicated region
        $region45: #{tpu_custom_call.1} parent=27 // pred_check
          %p282 = pneg %p108
        $region46: #{tpu_custom_call.1} parent=27 // pred_check_branch
          %284 = sbr.rel (%p282) target = $region48
        $region47: #{tpu_custom_call.1} parent=27 // pred_region
          %286 = vsyncadd %s278, 0
          %s287 = smul.addr %s26, 8
          %s288 = scalar_lea.hbm %s2, %s287
          %s290 = sshll.u32 %s281, 4
          %s291 = int_to_ptr.vmem [resolvable:$true] %s290
          %s292 = sshll.u32 %s288, 4
          %s293 = int_to_ptr.hbm [resolvable:$true] %s292
          %295 = dma.vmem_to_hbm [thread:$0]  %s291, 128, %s293, %s278
        $region48: #{tpu_custom_call.1} parent=27 // pred_fallthru
          _
      $region28: #{tpu_custom_call.1} parent=5 // pred_fallthru
        _
      %p296 = scmp.le.s32.totalorder 2, %s17
      // Predicated region
      $region49: #{tpu_custom_call.1} parent=5 // pred_check
        %p297 = pneg %p296
      $region50: #{tpu_custom_call.1} parent=5 // pred_check_branch
        %299 = sbr.rel (%p297) target = $region52
      $region51: #{tpu_custom_call.1} parent=5 // pred_region
        %s300 = ssub.s32 %s17, 2
        // Predicated region
        $region53: #{tpu_custom_call.1} parent=51 // pred_check
          %p301 = pneg %p114
        $region54: #{tpu_custom_call.1} parent=51 // pred_check_branch
          %303 = sbr.rel (%p301) target = $region56
        $region55: #{tpu_custom_call.1} parent=51 // pred_region
          %s304 = sand.u32 %s99, 1
          %s305 = scalar_lea.sflag [#allocation5], %s304
          %s306 = sand.u32 %s99, 1
          %s307 = smul.addr %s306, 8
          %s308 = scalar_lea.vmem [#allocation8], %s307
          %310 = dma.done %s305, 128
        $region56: #{tpu_custom_call.1} parent=51 // pred_fallthru
          _
      $region52: #{tpu_custom_call.1} parent=5 // pred_fallthru
        _
    $region6: #{tpu_custom_call.1} parent=1 // loop_footer
      %s21 = sadd.s32 1, %s17
    $region7: #{tpu_custom_call.1} parent=1 // loop_footer_branch
      %16 = sbr.rel target = $region3
    $region8: #{tpu_custom_call.1} parent=1 // loop_exit
      _
    %311 = vsyncpa [#allocation4], 1
    %s312 = scalar_lea.sflag [#allocation4], 1
    %313 = vsyncpa %s312, 1
    %314 = vsyncpa [#allocation7], 1
    %s315 = scalar_lea.sflag [#allocation7], 1
    %316 = vsyncpa %s315, 1
    %317 = vsyncpa [#allocation5], 1
    %s318 = scalar_lea.sflag [#allocation5], 1
    %319 = vsyncpa %s318, 1

</llo_original>
